<compile_context>
chip_gen: v5e
topology: v5e:2x2
jax: 0.10.0
libtpu: 0.0.40
codegen_flags: <defaults>
</compile_context>

<pallas_src>
import jax
import jax.numpy as jnp
from jax.experimental import pallas as pl
from jax.experimental.pallas import tpu as pltpu

OUT_PAD = 128      # lane-dense packed output width: [value | policy(A) | zero pad]
NEG_LARGE = -1e30  # finite mask sentinel (avoids inf - inf -> NaN)


def actor_critic_kernel(s_ref, w1_ref, b1_ref, w2_ref, b2_ref, out_ref):
    """One batch tile.

    s_ref  : (TB, NI)        state tile (already in the compute dtype)
    w1_ref : (NI, 2H)        [critic_linear1 | actor_linear1] fused weights
    b1_ref : (1, 2H)         fused first-layer bias (f32)
    w2_ref : (2H, OUT_PAD)   block-diagonal [w2c -> lane 0 | w2a -> lanes 1..A]
    b2_ref : (1, OUT_PAD)    fused second-layer bias; pad lanes pre-filled with
                             NEG_LARGE so no action mask is needed in-kernel
    out_ref: (TB, OUT_PAD)   lane 0 = value, lanes 1..A = policy, rest = 0
    """
    cdt = w1_ref.dtype                       # f32 or bf16 (MXU operand dtype)
    s = s_ref[...].astype(cdt)               # no-op when state already fed as cdt

    # Fused first layer (critic || actor), f32 accumulate, ReLU in f32.
    h = jnp.dot(s, w1_ref[...], preferred_element_type=jnp.float32)
    h = jnp.maximum(h + b1_ref[...], 0.0)

    # Fused second layer: block-diagonal weights -> [value | actor logits | -1e30 pad].
    out = jnp.dot(h.astype(cdt), w2_ref[...], preferred_element_type=jnp.float32)
    out = out + b2_ref[...]

    # Numerically-stable softmax over the action lanes.  Pad lanes already hold
    # NEG_LARGE (baked into b2f); only lane 0 (the value) needs masking here.
    lane = jax.lax.broadcasted_iota(jnp.int32, out.shape, dimension=1)
    is_value = lane == 0
    logits = jnp.where(is_value, NEG_LARGE, out)
    m = jnp.max(logits, axis=-1, keepdims=True)
    e = jnp.exp(logits - m)                  # masked lanes underflow to exactly 0.0
    inv_denom = pl.reciprocal(jnp.sum(e, axis=-1, keepdims=True))  # exact (EUP idle)
    policy = e * inv_denom

    # Lane 0 keeps the critic value; action lanes hold the policy; pad lanes = 0.
    out_ref[...] = jnp.where(is_value, out, policy).astype(out_ref.dtype)


def init_params(key, num_inputs, num_actions, hidden_size):
    """Deterministic synthetic init (uniform, nn.Linear-like scale), weights (in,out)."""
    ks = jax.random.split(key, 8)

    def lin(kw, kb, fan_in, fan_out):
        bound = 1.0 / jnp.sqrt(fan_in)
        w = jax.random.uniform(kw, (fan_in, fan_out), jnp.float32, -bound, bound)
        b = jax.random.uniform(kb, (1, fan_out), jnp.float32, -bound, bound)
        return w, b

    w1c, b1c = lin(ks[0], ks[1], num_inputs, hidden_size)
    w2c, b2c = lin(ks[2], ks[3], hidden_size, 1)
    w1a, b1a = lin(ks[4], ks[5], num_inputs, hidden_size)
    w2a, b2a = lin(ks[6], ks[7], hidden_size, num_actions)
    return dict(w1c=w1c, b1c=b1c, w2c=w2c, b2c=b2c,
                w1a=w1a, b1a=b1a, w2a=w2a, b2a=b2a)


def pack_params(params, weights_dtype=jnp.float32):
    """Fuse the 8 Linear tensors into 2 weight slabs + 2 bias rows.

    The second-layer bias pad lanes (>= 1 + num_actions) are pre-filled with
    NEG_LARGE so the kernel never has to build an action mask.
    """
    w1c, b1c = params["w1c"], params["b1c"]
    w2c, b2c = params["w2c"], params["b2c"]
    w1a, b1a = params["w1a"], params["b1a"]
    w2a, b2a = params["w2a"], params["b2a"]
    hidden = w1c.shape[1]
    num_actions = w2a.shape[1]
    assert 1 + num_actions <= OUT_PAD

    w1f = jnp.concatenate([w1c, w1a], axis=1)             # (NI, 2H)
    b1f = jnp.concatenate([b1c, b1a], axis=1)             # (1, 2H)

    w2f = jnp.zeros((2 * hidden, OUT_PAD), jnp.float32)   # block-diagonal
    w2f = w2f.at[:hidden, 0:1].set(w2c)                   # critic head -> lane 0
    w2f = w2f.at[hidden:, 1:1 + num_actions].set(w2a)     # actor head -> lanes 1..A

    b2f = jnp.full((1, OUT_PAD), NEG_LARGE, jnp.float32)  # pad lanes pre-masked
    b2f = b2f.at[0, 0].set(b2c[0, 0])
    b2f = b2f.at[0, 1:1 + num_actions].set(b2a[0])

    return (w1f.astype(weights_dtype), b1f.astype(jnp.float32),
            w2f.astype(weights_dtype), b2f.astype(jnp.float32))


def actor_critic_forward(state, packed, num_actions, *, block_b=1024,
                         out_dtype=jnp.float32):
    """state: (B, NI) or (NI,). Returns (value (B,1), policy (B,A)) in out_dtype."""
    w1f, b1f, w2f, b2f = packed
    compute_dtype = w1f.dtype

    state = jnp.asarray(state)
    if state.ndim == 1:                       # mirrors torch's state.unsqueeze(0)
        state = state[None, :]
    # bf16-weight path: feed the state as bf16 too (halves the HBM read and
    # removes a per-step in-kernel cast); f32 path is unchanged.
    state = state.astype(compute_dtype)
    B, num_inputs = state.shape
    h2 = w1f.shape[1]

    # --- batch tiling ------------------------------------------------------
    # Big tiles amortize the ~0.35us per-grid-step overhead; per-row VMEM is a
    # few KB so even TB=1024 is far below the scoped VMEM defaults.  Guarantee
    # at least two grid steps (when the batch allows) so the "parallel" batch
    # axis can shard across both TensorCores on v7x.
    TB = min(block_b, B)
    if B >= 16:
        TB = min(TB, -(-B // 2))              # >= 2 grid steps
    TB = max(8, -(-TB // 8) * 8)              # sublane multiple of 8
    B_pad = -(-B // TB) * TB
    if B_pad != B:
        state = jnp.pad(state, ((0, B_pad - B), (0, 0)))
    grid = (B_pad // TB,)

    weight_bytes = sum(int(a.size) * a.dtype.itemsize for a in (w1f, b1f, w2f, b2f))
    cost = pl.CostEstimate(
        flops=2 * B_pad * (num_inputs * h2 + h2 * OUT_PAD),
        transcendentals=B_pad * (OUT_PAD + 1),
        bytes_accessed=(weight_bytes
                        + B_pad * num_inputs * state.dtype.itemsize
                        + B_pad * OUT_PAD * jnp.dtype(out_dtype).itemsize),
    )

    out = pl.pallas_call(
        actor_critic_kernel,
        out_shape=jax.ShapeDtypeStruct((B_pad, OUT_PAD), out_dtype),
        grid=grid,
        in_specs=[
            pl.BlockSpec((TB, num_inputs), lambda i: (i, 0)),     # state tile
            pl.BlockSpec(w1f.shape, lambda i: (0, 0)),            # resident weights
            pl.BlockSpec(b1f.shape, lambda i: (0, 0)),
            pl.BlockSpec(w2f.shape, lambda i: (0, 0)),
            pl.BlockSpec(b2f.shape, lambda i: (0, 0)),
        ],
        out_specs=pl.BlockSpec((TB, OUT_PAD), lambda i: (i, 0)),  # lane-dense packed
        compiler_params=pltpu.CompilerParams(
            dimension_semantics=("parallel",)),                   # 2nd TC on v7x
        cost_estimate=cost,
    )(state, w1f, b1f, w2f, b2f)

    value = out[:B, 0:1]
    policy = out[:B, 1:1 + num_actions]
    return value, policy


def reference_forward(state, p):
    """Pure-JAX reference mirroring the PyTorch forward (per row)."""
    h_c = jnp.maximum(state @ p["w1c"] + p["b1c"], 0.0)
    value = h_c @ p["w2c"] + p["b2c"]
    h_a = jnp.maximum(state @ p["w1a"] + p["b1a"], 0.0)
    logits = h_a @ p["w2a"] + p["b2a"]
    policy = jax.nn.softmax(logits, axis=-1)
    return value, policy


if __name__ == "__main__":
    num_inputs, num_actions, hidden_size = 16, 8, 32
    batch = 256  # each row has exactly the PyTorch batch=1 forward semantics

    key = jax.random.PRNGKey(0)
    k_state, k_params = jax.random.split(key)
    states = jax.random.normal(k_state, (batch, num_inputs), jnp.float32)
    params = init_params(k_params, num_inputs, num_actions, hidden_size)
    value_ref, policy_ref = reference_forward(states, params)

    # --- f32 weights / f32 output: tight check against the pure-JAX reference ---
    packed_f32 = pack_params(params, jnp.float32)
    value, policy = actor_critic_forward(states, packed_f32, num_actions)
    jax.block_until_ready((value, policy))
    assert value.shape == (batch, 1) and policy.shape == (batch, num_actions)
    assert jnp.allclose(value, value_ref, atol=1e-4, rtol=1e-4)
    assert jnp.allclose(policy, policy_ref, atol=1e-4, rtol=1e-4)
    assert jnp.allclose(jnp.sum(policy, axis=1), 1.0, atol=1e-4)

    # --- bf16 weights/state/output (half HBM traffic), f32 MXU accumulation ---
    packed_bf16 = pack_params(params, jnp.bfloat16)
    v16, p16 = actor_critic_forward(states, packed_bf16, num_actions,
                                    out_dtype=jnp.bfloat16)
    jax.block_until_ready((v16, p16))
    assert jnp.allclose(v16.astype(jnp.float32), value_ref, atol=1e-1, rtol=1e-1)
    assert jnp.allclose(p16.astype(jnp.float32), policy_ref, atol=5e-2, rtol=5e-2)
    assert jnp.allclose(jnp.sum(p16.astype(jnp.float32), axis=1), 1.0, atol=5e-2)

    # --- single-state path (exactly the original unsqueeze(0) usage) ---
    v1, p1 = actor_critic_forward(states[0], packed_f32, num_actions)
    jax.block_until_ready((v1, p1))
    assert v1.shape == (1, 1) and p1.shape == (1, num_actions)
    assert jnp.allclose(v1, value_ref[0:1], atol=1e-4, rtol=1e-4)
    assert jnp.allclose(p1, policy_ref[0:1], atol=1e-4, rtol=1e-4)

    print("KERNEL_OK")
</pallas_src>

<mosaic_0001>
module attributes {stable_mosaic.version = 11 : i64} {
  func.func @actor_critic_kernel(%arg0: i32, %arg1: memref<128x16xf32, #tpu.memory_space<vmem>>, %arg2: memref<16x64xf32, #tpu.memory_space<vmem>>, %arg3: memref<1x64xf32, #tpu.memory_space<vmem>>, %arg4: memref<64x128xf32, #tpu.memory_space<vmem>>, %arg5: memref<1x128xf32, #tpu.memory_space<vmem>>, %arg6: memref<128x128xf32, #tpu.memory_space<vmem>>) attributes {dimension_semantics = [#tpu.dimension_semantics<parallel>], iteration_bounds = array<i64: 2>, scalar_prefetch = 0 : i64, scratch_operands = 0 : i64, tpu.core_type = #tpu.core_type<tc>, window_params = [{transform_indices = @transform_0, window_bounds = array<i64: 128, 16>}, {pipeline_mode = #tpu.pipeline_mode<synchronous>, transform_indices = @transform_1, window_bounds = array<i64: 16, 64>}, {pipeline_mode = #tpu.pipeline_mode<synchronous>, transform_indices = @transform_2, window_bounds = array<i64: 1, 64>}, {pipeline_mode = #tpu.pipeline_mode<synchronous>, transform_indices = @transform_3, window_bounds = array<i64: 64, 128>}, {pipeline_mode = #tpu.pipeline_mode<synchronous>, transform_indices = @transform_4, window_bounds = array<i64: 1, 128>}, {transform_indices = @transform_5, window_bounds = array<i64: 128, 128>}]} {
    %c0 = arith.constant 0 : index
    %c0_0 = arith.constant 0 : index
    %0 = vector.load %arg1[%c0, %c0_0] : memref<128x16xf32, #tpu.memory_space<vmem>>, vector<128x16xf32>
    %c0_1 = arith.constant 0 : index
    %c0_2 = arith.constant 0 : index
    %1 = vector.load %arg2[%c0_1, %c0_2] : memref<16x64xf32, #tpu.memory_space<vmem>>, vector<16x64xf32>
    %cst = arith.constant dense<0.000000e+00> : vector<128x64xf32>
    %2 = tpu.matmul %0, %1, %cst {dimension_numbers = #tpu.dot_dimension_numbers<[1], [0], [0], [1], [0, 0, 1, 1], [], []>} : vector<128x16xf32>, vector<16x64xf32>, vector<128x64xf32> -> vector<128x64xf32>
    %c0_3 = arith.constant 0 : index
    %c0_4 = arith.constant 0 : index
    %3 = vector.load %arg3[%c0_3, %c0_4] : memref<1x64xf32, #tpu.memory_space<vmem>>, vector<1x64xf32>
    %4 = vector.broadcast %3 : vector<1x64xf32> to vector<128x64xf32>
    %5 = arith.addf %2, %4 : vector<128x64xf32>
    %cst_5 = arith.constant 0.000000e+00 : f32
    %6 = vector.broadcast %cst_5 : f32 to vector<128x64xf32>
    %7 = arith.maximumf %5, %6 : vector<128x64xf32>
    %c0_6 = arith.constant 0 : index
    %c0_7 = arith.constant 0 : index
    %8 = vector.load %arg4[%c0_6, %c0_7] : memref<64x128xf32, #tpu.memory_space<vmem>>, vector<64x128xf32>
    %cst_8 = arith.constant dense<0.000000e+00> : vector<128x128xf32>
    %9 = tpu.matmul %7, %8, %cst_8 {dimension_numbers = #tpu.dot_dimension_numbers<[1], [0], [0], [1], [0, 0, 1, 1], [], []>} : vector<128x64xf32>, vector<64x128xf32>, vector<128x128xf32> -> vector<128x128xf32>
    %c0_9 = arith.constant 0 : index
    %c0_10 = arith.constant 0 : index
    %10 = vector.load %arg5[%c0_9, %c0_10] : memref<1x128xf32, #tpu.memory_space<vmem>>, vector<1x128xf32>
    %11 = vector.broadcast %10 : vector<1x128xf32> to vector<128x128xf32>
    %12 = arith.addf %9, %11 : vector<128x128xf32>
    %13 = tpu.iota {dimensions = array<i32: 1>} : vector<128x128xi32>
    %c0_i32 = arith.constant 0 : i32
    %14 = vector.broadcast %c0_i32 : i32 to vector<128x128xi32>
    %15 = arith.cmpi eq, %13, %14 : vector<128x128xi32>
    %cst_11 = arith.constant -1.000000e+30 : f32
    %16 = vector.broadcast %cst_11 : f32 to vector<128x128xf32>
    %17 = arith.select %15, %16, %12 : vector<128x128xi1>, vector<128x128xf32>
    %cst_12 = arith.constant dense<0xFF800000> : vector<128xf32>
    %18 = vector.multi_reduction <maximumf>, %17, %cst_12 [1] : vector<128x128xf32> to vector<128xf32>
    %19 = vector.shape_cast %18 : vector<128xf32> to vector<128x1xf32>
    %20 = vector.broadcast %19 : vector<128x1xf32> to vector<128x128xf32>
    %21 = arith.subf %17, %20 : vector<128x128xf32>
    %22 = math.exp %21 : vector<128x128xf32>
    %cst_13 = arith.constant dense<0.000000e+00> : vector<128xf32>
    %23 = vector.multi_reduction <add>, %22, %cst_13 [1] : vector<128x128xf32> to vector<128xf32>
    %24 = vector.shape_cast %23 : vector<128xf32> to vector<128x1xf32>
    %25 = tpu.reciprocal %24 : vector<128x1xf32> -> vector<128x1xf32>
    %26 = vector.broadcast %25 : vector<128x1xf32> to vector<128x128xf32>
    %27 = arith.mulf %22, %26 : vector<128x128xf32>
    %28 = arith.select %15, %12, %27 : vector<128x128xi1>, vector<128x128xf32>
    %c0_14 = arith.constant 0 : index
    %c0_15 = arith.constant 0 : index
    %29 = vector.load %arg6[%c0_14, %c0_15] : memref<128x128xf32, #tpu.memory_space<vmem>>, vector<128x128xf32>
    tpu.vector_store %arg6[%c0_14, %c0_15], %28 {strides = array<i32>} : memref<128x128xf32, #tpu.memory_space<vmem>>, vector<128x128xf32>,
    return
  }
  func.func @transform_0(%arg0: i32) -> (i32, i32) {
    %c0_i32 = arith.constant 0 : i32
    %c0_i32_0 = arith.constant 0 : i32
    return %arg0, %c0_i32 : i32, i32
  }
  func.func @transform_1(%arg0: i32) -> (i32, i32) {
    %c0_i32 = arith.constant 0 : i32
    %c0_i32_0 = arith.constant 0 : i32
    %c0_i32_1 = arith.constant 0 : i32
    return %c0_i32, %c0_i32_0 : i32, i32
  }
  func.func @transform_2(%arg0: i32) -> (i32, i32) {
    %c0_i32 = arith.constant 0 : i32
    %c0_i32_0 = arith.constant 0 : i32
    %c0_i32_1 = arith.constant 0 : i32
    return %c0_i32, %c0_i32_0 : i32, i32
  }
  func.func @transform_3(%arg0: i32) -> (i32, i32) {
    %c0_i32 = arith.constant 0 : i32
    %c0_i32_0 = arith.constant 0 : i32
    %c0_i32_1 = arith.constant 0 : i32
    return %c0_i32, %c0_i32_0 : i32, i32
  }
  func.func @transform_4(%arg0: i32) -> (i32, i32) {
    %c0_i32 = arith.constant 0 : i32
    %c0_i32_0 = arith.constant 0 : i32
    %c0_i32_1 = arith.constant 0 : i32
    return %c0_i32, %c0_i32_0 : i32, i32
  }
  func.func @transform_5(%arg0: i32) -> (i32, i32) {
    %c0_i32 = arith.constant 0 : i32
    %c0_i32_0 = arith.constant 0 : i32
    return %arg0, %c0_i32 : i32, i32
  }
}

</mosaic_0001>

<llo_original>
// kernel: tpu_custom_call.1
$region0: #{tpu_custom_call.1}
  #allocation0 [shape = 'u32[]', space=smem, size = 0x4, offset = 0x4, fixed_abs, tag = 'smem constant byte address 0x4 - core index']
  #allocation1 [shape = 'u32[72,128]{1,0:T(1,128)}', space=vmem, size = 0x9000, scoped, tag = 'internal scratch']
  %s0 = inlined_call_operand.vmem [shape: f32[256,16], index: 0, kind: input, shape index: {}]
  %s1 = inlined_call_operand.vmem [shape: f32[16,64], index: 1, kind: input, shape index: {}]
  %s2 = inlined_call_operand.vmem [shape: f32[1,64], index: 2, kind: input, shape index: {}]
  %s3 = inlined_call_operand.vmem [shape: f32[64,128], index: 3, kind: input, shape index: {}]
  %s4 = inlined_call_operand.vmem [shape: f32[1,128], index: 4, kind: input, shape index: {}]
  %s5 = inlined_call_operand.hbm [shape: f32[256,128], index: 5, kind: output, shape index: {}]
  %s6 = sld [smem:[#allocation0]]
  $region53: #{tpu_custom_call.1} parent=0
    _
  %s8 = ssub.s32 1, %s6
  %s9 = scalar_select 0, %s8, %s6
  $region1: #{tpu_custom_call.1} parent=0
    #allocation2 [shape = 'u8[131072]{0}', space=vmem, size = 0x20000, scoped, tag = 'output window, operand 0']
    #allocation3 [shape = 's32[2]{0}', space=sflag, size = 0x8, scoped, tag = 'scoped memory for tpu_custom_call.1']
    %10 = vsyncpa [#allocation3], 0
    %s11 = scalar_lea.sflag [#allocation3], 1
    %12 = vsyncpa %s11, 0
    loop: start=0, step=1, limit=4
    $region2: #{tpu_custom_call.1} parent=1 // loop_pre_header
      _
    $region3: #{tpu_custom_call.1} parent=1 // loop_header
      %s14 = sphi 0, %s18
      %p15 = scmp.ge.s32.totalorder %s14, 4
      %s24 = sphi 0, %s26
      %s27 = sphi 0, %s24
      %s28 = sphi 0, %s27
      %s44 = sphi 0, %s28
      %s48 = sphi 0, %s48
      %s50 = sphi 0, %s48
      %s51 = sphi 0, %s50
      %s65 = sphi 0, %s51
      %s69 = sphi 0, %s69
      %s71 = sphi 0, %s69
      %s72 = sphi 0, %s71
      %s86 = sphi 0, %s72
      %s90 = sphi 0, %s90
      %s92 = sphi 0, %s90
      %s93 = sphi 0, %s92
      %s107 = sphi 0, %s93
      %s111 = sphi 0, %s111
      %s113 = sphi 0, %s111
      %s114 = sphi 0, %s113
      %s128 = sphi 0, %s114
      %s134 = sphi 0, %s136
      %s137 = sphi 0, %s134
      %s138 = sphi 0, %s137
      %s154 = sphi 0, %s138
    $region4: #{tpu_custom_call.1} parent=1 // loop_header_branch
      %17 = sbr.rel (%p15) target = $region8
    $region5: #{tpu_custom_call.1} parent=1 // loop_body
      %s19 = ssub.s32 %s14, 1
      %s20 = ssub.s32 %s14, 2
      %s21 = sadd.s32 %s14, 1
      %s22 = ssub.s32 %s14, %s21
      %p23 = scmp.eq.s32.totalorder %s22, 0
      %s25 = sadd.s32 %s24, 1
      %s26 = scalar_select %p23, %s24, %s25
      %p29 = pneg %p23
      %p30 = scmp.eq.s32.totalorder %s14, 1
      %p31 = por %p29, %p30
      %p32 = scmp.ne.s32.totalorder %s24, %s27
      %p33 = scmp.eq.s32.totalorder %s14, 0
      %p34 = por %p32, %p33
      %p35 = scmp.ne.s32.totalorder %s24, %s27
      %p36 = scmp.eq.s32.totalorder %s19, 1
      %p37 = por %p35, %p36
      %p38 = scmp.ne.s32.totalorder %s27, %s28
      %p39 = scmp.eq.s32.totalorder %s19, 0
      %p40 = por %p38, %p39
      %p41 = scmp.ne.s32.totalorder %s27, %s28
      %p42 = scmp.eq.s32.totalorder %s20, 1
      %p43 = por %p41, %p42
      %p45 = scmp.ne.s32.totalorder %s28, %s44
      %p46 = scmp.eq.s32.totalorder %s20, 0
      %p47 = por %p45, %p46
      %s49 = sadd.s32 %s48, 1
      %p52 = scmp.eq.s32.totalorder %s14, 1
      %p53 = scmp.ne.s32.totalorder %s48, %s50
      %p54 = scmp.eq.s32.totalorder %s14, 0
      %p55 = por %p53, %p54
      %p56 = scmp.ne.s32.totalorder %s48, %s50
      %p57 = scmp.eq.s32.totalorder %s19, 1
      %p58 = por %p56, %p57
      %p59 = scmp.ne.s32.totalorder %s50, %s51
      %p60 = scmp.eq.s32.totalorder %s19, 0
      %p61 = por %p59, %p60
      %p62 = scmp.ne.s32.totalorder %s50, %s51
      %p63 = scmp.eq.s32.totalorder %s20, 1
      %p64 = por %p62, %p63
      %p66 = scmp.ne.s32.totalorder %s51, %s65
      %p67 = scmp.eq.s32.totalorder %s20, 0
      %p68 = por %p66, %p67
      %s70 = sadd.s32 %s69, 1
      %p73 = scmp.eq.s32.totalorder %s14, 1
      %p74 = scmp.ne.s32.totalorder %s69, %s71
      %p75 = scmp.eq.s32.totalorder %s14, 0
      %p76 = por %p74, %p75
      %p77 = scmp.ne.s32.totalorder %s69, %s71
      %p78 = scmp.eq.s32.totalorder %s19, 1
      %p79 = por %p77, %p78
      %p80 = scmp.ne.s32.totalorder %s71, %s72
      %p81 = scmp.eq.s32.totalorder %s19, 0
      %p82 = por %p80, %p81
      %p83 = scmp.ne.s32.totalorder %s71, %s72
      %p84 = scmp.eq.s32.totalorder %s20, 1
      %p85 = por %p83, %p84
      %p87 = scmp.ne.s32.totalorder %s72, %s86
      %p88 = scmp.eq.s32.totalorder %s20, 0
      %p89 = por %p87, %p88
      %s91 = sadd.s32 %s90, 1
      %p94 = scmp.eq.s32.totalorder %s14, 1
      %p95 = scmp.ne.s32.totalorder %s90, %s92
      %p96 = scmp.eq.s32.totalorder %s14, 0
      %p97 = por %p95, %p96
      %p98 = scmp.ne.s32.totalorder %s90, %s92
      %p99 = scmp.eq.s32.totalorder %s19, 1
      %p100 = por %p98, %p99
      %p101 = scmp.ne.s32.totalorder %s92, %s93
      %p102 = scmp.eq.s32.totalorder %s19, 0
      %p103 = por %p101, %p102
      %p104 = scmp.ne.s32.totalorder %s92, %s93
      %p105 = scmp.eq.s32.totalorder %s20, 1
      %p106 = por %p104, %p105
      %p108 = scmp.ne.s32.totalorder %s93, %s107
      %p109 = scmp.eq.s32.totalorder %s20, 0
      %p110 = por %p108, %p109
      %s112 = sadd.s32 %s111, 1
      %p115 = scmp.eq.s32.totalorder %s14, 1
      %p116 = scmp.ne.s32.totalorder %s111, %s113
      %p117 = scmp.eq.s32.totalorder %s14, 0
      %p118 = por %p116, %p117
      %p119 = scmp.ne.s32.totalorder %s111, %s113
      %p120 = scmp.eq.s32.totalorder %s19, 1
      %p121 = por %p119, %p120
      %p122 = scmp.ne.s32.totalorder %s113, %s114
      %p123 = scmp.eq.s32.totalorder %s19, 0
      %p124 = por %p122, %p123
      %p125 = scmp.ne.s32.totalorder %s113, %s114
      %p126 = scmp.eq.s32.totalorder %s20, 1
      %p127 = por %p125, %p126
      %p129 = scmp.ne.s32.totalorder %s114, %s128
      %p130 = scmp.eq.s32.totalorder %s20, 0
      %p131 = por %p129, %p130
      %s132 = ssub.s32 %s14, %s21
      %p133 = scmp.eq.s32.totalorder %s132, 0
      %s135 = sadd.s32 %s134, 1
      %s136 = scalar_select %p133, %s134, %s135
      %p139 = pneg %p133
      %p140 = scmp.eq.s32.totalorder %s14, 1
      %p141 = por %p139, %p140
      %p142 = scmp.ne.s32.totalorder %s134, %s137
      %p143 = scmp.eq.s32.totalorder %s14, 0
      %p144 = por %p142, %p143
      %p145 = scmp.ne.s32.totalorder %s134, %s137
      %p146 = scmp.eq.s32.totalorder %s19, 1
      %p147 = por %p145, %p146
      %p148 = scmp.ne.s32.totalorder %s137, %s138
      %p149 = scmp.eq.s32.totalorder %s19, 0
      %p150 = por %p148, %p149
      %p151 = scmp.ne.s32.totalorder %s137, %s138
      %p152 = scmp.eq.s32.totalorder %s20, 1
      %p153 = por %p151, %p152
      %p155 = scmp.ne.s32.totalorder %s138, %s154
      %p156 = scmp.eq.s32.totalorder %s20, 0
      %p157 = por %p155, %p156
      %p158 = scmp.le.s32.totalorder 1, %s14
      %p159 = scmp.lt.s32.totalorder %s14, 3
      %p160 = pnand %p158, %p159
      %p161 = pneg %p160
      // Predicated region
      $region9: #{tpu_custom_call.1} parent=5 // pred_check
        _
      $region10: #{tpu_custom_call.1} parent=5 // pred_check_branch
        %163 = sbr.rel (%p160) target = $region12
      $region11: #{tpu_custom_call.1} parent=5 // pred_region
        %s164 = ssub.s32 %s14, 1
        // Predicated region
        $region13: #{tpu_custom_call.1} parent=11 // pred_check
          %p165 = pneg %p61
        $region14: #{tpu_custom_call.1} parent=11 // pred_check_branch
          %167 = sbr.rel (%p165) target = $region16
        $region15: #{tpu_custom_call.1} parent=11 // pred_region
          _
        $region16: #{tpu_custom_call.1} parent=11 // pred_fallthru
          _
        // Predicated region
        $region17: #{tpu_custom_call.1} parent=11 // pred_check
          %p168 = pneg %p82
        $region18: #{tpu_custom_call.1} parent=11 // pred_check_branch
          %170 = sbr.rel (%p168) target = $region20
        $region19: #{tpu_custom_call.1} parent=11 // pred_region
          _
        $region20: #{tpu_custom_call.1} parent=11 // pred_fallthru
          _
        // Predicated region
        $region21: #{tpu_custom_call.1} parent=11 // pred_check
          %p171 = pneg %p103
        $region22: #{tpu_custom_call.1} parent=11 // pred_check_branch
          %173 = sbr.rel (%p171) target = $region24
        $region23: #{tpu_custom_call.1} parent=11 // pred_region
          _
        $region24: #{tpu_custom_call.1} parent=11 // pred_fallthru
          _
        // Predicated region
        $region25: #{tpu_custom_call.1} parent=11 // pred_check
          %p174 = pneg %p124
        $region26: #{tpu_custom_call.1} parent=11 // pred_check_branch
          %176 = sbr.rel (%p174) target = $region28
        $region27: #{tpu_custom_call.1} parent=11 // pred_region
          _
        $region28: #{tpu_custom_call.1} parent=11 // pred_fallthru
          _
      $region12: #{tpu_custom_call.1} parent=5 // pred_fallthru
        _
      %p177 = scmp.lt.s32.totalorder %s14, 2
      // Predicated region
      $region29: #{tpu_custom_call.1} parent=5 // pred_check
        %p178 = pneg %p177
      $region30: #{tpu_custom_call.1} parent=5 // pred_check_branch
        %180 = sbr.rel (%p178) target = $region32
      $region31: #{tpu_custom_call.1} parent=5 // pred_region
        // Predicated region
        $region33: #{tpu_custom_call.1} parent=31 // pred_check
          %p181 = pneg %p34
        $region34: #{tpu_custom_call.1} parent=31 // pred_check_branch
          %183 = sbr.rel (%p181) target = $region36
        $region35: #{tpu_custom_call.1} parent=31 // pred_region
          %s184 = smul.u32 16, %s14
          %p185 = scmp.lt.s32.totalorder %s184, 31
          %s186 = scalar_select %p185, %s184, 31
          %s187 = smul.addr %s186, 8
          %s188 = scalar_lea.vmem %s0, %s187
          %s189 = smul.u32 16, %s14
        $region36: #{tpu_custom_call.1} parent=31 // pred_fallthru
          _
      $region32: #{tpu_custom_call.1} parent=5 // pred_fallthru
        _
      %p190 = scmp.le.s32.totalorder 1, %s14
      %p191 = scmp.lt.s32.totalorder %s14, 3
      %p192 = pnand %p190, %p191
      %p193 = pneg %p192
      // Predicated region
      $region37: #{tpu_custom_call.1} parent=5 // pred_check
        _
      $region38: #{tpu_custom_call.1} parent=5 // pred_check_branch
        %195 = sbr.rel (%p192) target = $region40
      $region39: #{tpu_custom_call.1} parent=5 // pred_region
        %s196 = ssub.s32 %s14, 1
        %s197 = smul.u32 16, %s19
        %p198 = scmp.lt.s32.totalorder %s197, 31
        %s199 = scalar_select %p198, %s197, 31
        %s200 = smul.addr %s199, 8
        %s201 = scalar_lea.vmem %s0, %s200
        %p202 = pneg %p40
        %p203 = pneg %p37
        %p204 = pneg %p61
        %p205 = pneg %p58
        %p206 = pneg %p82
        %p207 = pneg %p79
        %p208 = pneg %p103
        %p209 = pneg %p100
        %p210 = pneg %p124
        %p211 = pneg %p121
        %p212 = pneg %p150
        %p213 = pneg %p147
        %s214 = sand.u32 %s137, 1
        %s215 = scalar_lea.sflag [#allocation3], %s214
        %s216 = sand.u32 %s137, 1
        %s217 = smul.addr %s216, 128
        %s218 = scalar_lea.vmem [#allocation2], %s217
        %s219 = smul.u32 16, %s19
        %p220 = scmp.lt.s32.totalorder %s219, 31
        %s221 = scalar_select %p220, %s219, 31
        %s222 = smul.addr %s221, 8
        %s223 = scalar_lea.vmem %s0, %s222
        %s224 = smul.u32 16, %s19
        %s225 = smul.u32 16, %s19
        %v226 = vld [vmem:[%s223] sm:$0xff]
        %v227 = vld [vmem:[%s223 + $0x8] sm:$0xff]
        %v228 = vld [vmem:[%s223 + $0x10] sm:$0xff]
        %v229 = vld [vmem:[%s223 + $0x18] sm:$0xff]
        %v230 = vld [vmem:[%s223 + $0x20] sm:$0xff]
        %v231 = vld [vmem:[%s223 + $0x28] sm:$0xff]
        %v232 = vld [vmem:[%s223 + $0x30] sm:$0xff]
        %v233 = vld [vmem:[%s223 + $0x38] sm:$0xff]
        %v234 = vld [vmem:[%s223 + $0x40] sm:$0xff]
        %v235 = vld [vmem:[%s223 + $0x48] sm:$0xff]
        %v236 = vld [vmem:[%s223 + $0x50] sm:$0xff]
        %v237 = vld [vmem:[%s223 + $0x58] sm:$0xff]
        %v238 = vld [vmem:[%s223 + $0x60] sm:$0xff]
        %v239 = vld [vmem:[%s223 + $0x68] sm:$0xff]
        %v240 = vld [vmem:[%s223 + $0x70] sm:$0xff]
        %v241 = vld [vmem:[%s223 + $0x78] sm:$0xff]
        %v242 = vld [vmem:[%s1] sm:$0xff]
        %v243 = vld [vmem:[%s1 + $0x8] sm:$0xff]
        %v244 = vld [vmem:[%s2] sm:$0x1]
        %v246 = vperm.slane %v244, 0
        %vm248 = vcmask 130048
        %v250 = vsel %vm248, %v226, 0
        %v253 = vsel %vm248, %v227, 0
        %v256 = vsel %vm248, %v228, 0
        %v259 = vsel %vm248, %v229, 0
        %v262 = vsel %vm248, %v230, 0
        %v265 = vsel %vm248, %v231, 0
        %v268 = vsel %vm248, %v232, 0
        %v271 = vsel %vm248, %v233, 0
        %v274 = vsel %vm248, %v234, 0
        %v277 = vsel %vm248, %v235, 0
        %v280 = vsel %vm248, %v236, 0
        %v283 = vsel %vm248, %v237, 0
        %v286 = vsel %vm248, %v238, 0
        %v289 = vsel %vm248, %v239, 0
        %v292 = vsel %vm248, %v240, 0
        %v295 = vsel %vm248, %v241, 0
        %297 = vmatpush.msra.mxu0 0.0
        %298 = vmatpush.msra.mxu0 0.0
        %299 = vmatpush.msra.mxu0 0.0
        %300 = vmatpush.msra.mxu0 0.0
        %301 = vmatpush.msra.mxu0 0.0
        %302 = vmatpush.msra.mxu0 0.0
        %303 = vmatpush.msra.mxu0 0.0
        %304 = vmatpush.msra.mxu0 0.0
        %305 = vmatpush.msra.mxu0 0.0
        %306 = vmatpush.msra.mxu0 0.0
        %307 = vmatpush.msra.mxu0 0.0
        %308 = vmatpush.msra.mxu0 0.0
        %309 = vmatpush.msra.mxu0 0.0
        %310 = vmatpush.msra.mxu0 0.0
        %311 = vmatpush.msra.mxu0 %v243
        %312 = vmatpush.msra.mxu0 %v242
        %313 = vmatmul.f32.gmra.mxu0 %v250
        %v314 = vpop.f32.mrf.mxu0
        %v315 = vadd.f32 %v246, %v314
        %316 = vmatmul.f32.gmra.mxu0 %v253
        %v317 = vpop.f32.mrf.mxu0
        %v318 = vadd.f32 %v246, %v317
        %319 = vmatmul.f32.gmra.mxu0 %v256
        %v320 = vpop.f32.mrf.mxu0
        %v321 = vadd.f32 %v246, %v320
        %322 = vmatmul.f32.gmra.mxu0 %v259
        %v323 = vpop.f32.mrf.mxu0
        %v324 = vadd.f32 %v246, %v323
        %325 = vmatmul.f32.gmra.mxu0 %v262
        %v326 = vpop.f32.mrf.mxu0
        %v327 = vadd.f32 %v246, %v326
        %328 = vmatmul.f32.gmra.mxu0 %v265
        %v329 = vpop.f32.mrf.mxu0
        %v330 = vadd.f32 %v246, %v329
        %331 = vmatmul.f32.gmra.mxu0 %v268
        %v332 = vpop.f32.mrf.mxu0
        %v333 = vadd.f32 %v246, %v332
        %334 = vmatmul.f32.gmra.mxu0 %v271
        %v335 = vpop.f32.mrf.mxu0
        %v336 = vadd.f32 %v246, %v335
        %337 = vmatmul.f32.gmra.mxu0 %v274
        %v338 = vpop.f32.mrf.mxu0
        %v339 = vadd.f32 %v246, %v338
        %340 = vmatmul.f32.gmra.mxu0 %v277
        %v341 = vpop.f32.mrf.mxu0
        %v342 = vadd.f32 %v246, %v341
        %343 = vmatmul.f32.gmra.mxu0 %v280
        %v344 = vpop.f32.mrf.mxu0
        %v345 = vadd.f32 %v246, %v344
        %346 = vmatmul.f32.gmra.mxu0 %v283
        %v347 = vpop.f32.mrf.mxu0
        %v348 = vadd.f32 %v246, %v347
        %349 = vmatmul.f32.gmra.mxu0 %v286
        %v350 = vpop.f32.mrf.mxu0
        %v351 = vadd.f32 %v246, %v350
        %352 = vmatmul.f32.gmra.mxu0 %v289
        %v353 = vpop.f32.mrf.mxu0
        %v354 = vadd.f32 %v246, %v353
        %355 = vmatmul.f32.gmra.mxu0 %v292
        %v356 = vpop.f32.mrf.mxu0
        %v357 = vadd.f32 %v246, %v356
        %358 = vmatmul.f32.gmra.mxu0 %v295
        %v359 = vpop.f32.mrf.mxu0
        %v360 = vadd.f32 %v246, %v359
        %361 = vdwg.mxu0
        %v362 = vmax.f32 %v315, 0.0
        %v363 = vmax.f32 %v318, 0.0
        %v364 = vmax.f32 %v321, 0.0
        %v365 = vmax.f32 %v324, 0.0
        %v366 = vmax.f32 %v327, 0.0
        %v367 = vmax.f32 %v330, 0.0
        %v368 = vmax.f32 %v333, 0.0
        %v369 = vmax.f32 %v336, 0.0
        %v370 = vmax.f32 %v339, 0.0
        %v371 = vmax.f32 %v342, 0.0
        %v372 = vmax.f32 %v345, 0.0
        %v373 = vmax.f32 %v348, 0.0
        %v374 = vmax.f32 %v351, 0.0
        %v375 = vmax.f32 %v354, 0.0
        %v376 = vmax.f32 %v357, 0.0
        %v377 = vmax.f32 %v360, 0.0
        %v378 = vld [vmem:[%s3] sm:$0xff]
        %v379 = vld [vmem:[%s3 + $0x8] sm:$0xff]
        %v380 = vld [vmem:[%s3 + $0x10] sm:$0xff]
        %v381 = vld [vmem:[%s3 + $0x18] sm:$0xff]
        %v382 = vld [vmem:[%s3 + $0x20] sm:$0xff]
        %v383 = vld [vmem:[%s3 + $0x28] sm:$0xff]
        %v384 = vld [vmem:[%s3 + $0x30] sm:$0xff]
        %v385 = vld [vmem:[%s3 + $0x38] sm:$0xff]
        %v386 = vld [vmem:[%s4] sm:$0x1]
        %v388 = vperm.slane %v386, 0
        %vm390 = vcmask 523264
        %v392 = vsel %vm390, %v362, 0
        %v395 = vsel %vm390, %v363, 0
        %v398 = vsel %vm390, %v364, 0
        %v401 = vsel %vm390, %v365, 0
        %v404 = vsel %vm390, %v366, 0
        %v407 = vsel %vm390, %v367, 0
        %v410 = vsel %vm390, %v368, 0
        %v413 = vsel %vm390, %v369, 0
        %v416 = vsel %vm390, %v370, 0
        %v419 = vsel %vm390, %v371, 0
        %v422 = vsel %vm390, %v372, 0
        %v425 = vsel %vm390, %v373, 0
        %v428 = vsel %vm390, %v374, 0
        %v431 = vsel %vm390, %v375, 0
        %v434 = vsel %vm390, %v376, 0
        %v437 = vsel %vm390, %v377, 0
        %439 = vmatpush.msra.mxu0 0.0
        %440 = vmatpush.msra.mxu0 0.0
        %441 = vmatpush.msra.mxu0 0.0
        %442 = vmatpush.msra.mxu0 0.0
        %443 = vmatpush.msra.mxu0 0.0
        %444 = vmatpush.msra.mxu0 0.0
        %445 = vmatpush.msra.mxu0 0.0
        %446 = vmatpush.msra.mxu0 0.0
        %447 = vmatpush.msra.mxu0 %v385
        %448 = vmatpush.msra.mxu0 %v384
        %449 = vmatpush.msra.mxu0 %v383
        %450 = vmatpush.msra.mxu0 %v382
        %451 = vmatpush.msra.mxu0 %v381
        %452 = vmatpush.msra.mxu0 %v380
        %453 = vmatpush.msra.mxu0 %v379
        %454 = vmatpush.msra.mxu0 %v378
        %455 = vmatmul.f32.gmra.mxu0 %v392
        %v456 = vpop.f32.mrf.mxu0
        %v457 = vadd.f32 %v388, %v456
        %458 = vmatmul.f32.gmra.mxu0 %v395
        %v459 = vpop.f32.mrf.mxu0
        %v460 = vadd.f32 %v388, %v459
        %461 = vmatmul.f32.gmra.mxu0 %v398
        %v462 = vpop.f32.mrf.mxu0
        %v463 = vadd.f32 %v388, %v462
        %464 = vmatmul.f32.gmra.mxu0 %v401
        %v465 = vpop.f32.mrf.mxu0
        %v466 = vadd.f32 %v388, %v465
        %467 = vmatmul.f32.gmra.mxu0 %v404
        %v468 = vpop.f32.mrf.mxu0
        %v469 = vadd.f32 %v388, %v468
        %470 = vmatmul.f32.gmra.mxu0 %v407
        %v471 = vpop.f32.mrf.mxu0
        %v472 = vadd.f32 %v388, %v471
        %473 = vmatmul.f32.gmra.mxu0 %v410
        %v474 = vpop.f32.mrf.mxu0
        %v475 = vadd.f32 %v388, %v474
        %476 = vmatmul.f32.gmra.mxu0 %v413
        %v477 = vpop.f32.mrf.mxu0
        %v478 = vadd.f32 %v388, %v477
        %479 = vmatmul.f32.gmra.mxu0 %v416
        %v480 = vpop.f32.mrf.mxu0
        %v481 = vadd.f32 %v388, %v480
        %482 = vmatmul.f32.gmra.mxu0 %v419
        %v483 = vpop.f32.mrf.mxu0
        %v484 = vadd.f32 %v388, %v483
        %485 = vmatmul.f32.gmra.mxu0 %v422
        %v486 = vpop.f32.mrf.mxu0
        %v487 = vadd.f32 %v388, %v486
        %488 = vmatmul.f32.gmra.mxu0 %v425
        %v489 = vpop.f32.mrf.mxu0
        %v490 = vadd.f32 %v388, %v489
        %491 = vmatmul.f32.gmra.mxu0 %v428
        %v492 = vpop.f32.mrf.mxu0
        %v493 = vadd.f32 %v388, %v492
        %494 = vmatmul.f32.gmra.mxu0 %v431
        %v495 = vpop.f32.mrf.mxu0
        %v496 = vadd.f32 %v388, %v495
        %497 = vmatmul.f32.gmra.mxu0 %v434
        %v498 = vpop.f32.mrf.mxu0
        %v499 = vadd.f32 %v388, %v498
        %500 = vmatmul.f32.gmra.mxu0 %v437
        %v501 = vpop.f32.mrf.mxu0
        %v502 = vadd.f32 %v388, %v501
        %503 = vdwg.mxu0
        %v504 = vlaneseq
        %v505 = vand.u32 %v504, 127
        %vm506 = vcmp.eq.s32.totalorder %v505, 0
        %v507 = vsel %vm506, -1e+30, %v457
        %v508 = vsel %vm506, -1e+30, %v460
        %v509 = vsel %vm506, -1e+30, %v463
        %v510 = vsel %vm506, -1e+30, %v466
        %v511 = vsel %vm506, -1e+30, %v469
        %v512 = vsel %vm506, -1e+30, %v472
        %v513 = vsel %vm506, -1e+30, %v475
        %v514 = vsel %vm506, -1e+30, %v478
        %v515 = vsel %vm506, -1e+30, %v481
        %v516 = vsel %vm506, -1e+30, %v484
        %v517 = vsel %vm506, -1e+30, %v487
        %v518 = vsel %vm506, -1e+30, %v490
        %v519 = vsel %vm506, -1e+30, %v493
        %v520 = vsel %vm506, -1e+30, %v496
        %v521 = vsel %vm506, -1e+30, %v499
        %v522 = vsel %vm506, -1e+30, %v502
        %523 = vmax.xlane.f32.xlu0 %v507
        %v524 = vpop.xlane.xlu0 %523
        %525 = vmax.xlane.f32.xlu0 %v508
        %v526 = vpop.xlane.xlu0 %525
        %527 = vmax.xlane.f32.xlu0 %v509
        %v528 = vpop.xlane.xlu0 %527
        %529 = vmax.xlane.f32.xlu0 %v510
        %v530 = vpop.xlane.xlu0 %529
        %531 = vmax.xlane.f32.xlu0 %v511
        %v532 = vpop.xlane.xlu0 %531
        %533 = vmax.xlane.f32.xlu0 %v512
        %v534 = vpop.xlane.xlu0 %533
        %535 = vmax.xlane.f32.xlu0 %v513
        %v536 = vpop.xlane.xlu0 %535
        %537 = vmax.xlane.f32.xlu0 %v514
        %v538 = vpop.xlane.xlu0 %537
        %539 = vmax.xlane.f32.xlu0 %v515
        %v540 = vpop.xlane.xlu0 %539
        %541 = vmax.xlane.f32.xlu0 %v516
        %v542 = vpop.xlane.xlu0 %541
        %543 = vmax.xlane.f32.xlu0 %v517
        %v544 = vpop.xlane.xlu0 %543
        %545 = vmax.xlane.f32.xlu0 %v518
        %v546 = vpop.xlane.xlu0 %545
        %547 = vmax.xlane.f32.xlu0 %v519
        %v548 = vpop.xlane.xlu0 %547
        %549 = vmax.xlane.f32.xlu0 %v520
        %v550 = vpop.xlane.xlu0 %549
        %551 = vmax.xlane.f32.xlu0 %v521
        %v552 = vpop.xlane.xlu0 %551
        %553 = vmax.xlane.f32.xlu0 %v522
        %v554 = vpop.xlane.xlu0 %553
        %v555 = vsub.f32 %v507, %v524
        %v556 = vsub.f32 %v508, %v526
        %v557 = vsub.f32 %v509, %v528
        %v558 = vsub.f32 %v510, %v530
        %v559 = vsub.f32 %v511, %v532
        %v560 = vsub.f32 %v512, %v534
        %v561 = vsub.f32 %v513, %v536
        %v562 = vsub.f32 %v514, %v538
        %v563 = vsub.f32 %v515, %v540
        %v564 = vsub.f32 %v516, %v542
        %v565 = vsub.f32 %v517, %v544
        %v566 = vsub.f32 %v518, %v546
        %v567 = vsub.f32 %v519, %v548
        %v568 = vsub.f32 %v520, %v550
        %v569 = vsub.f32 %v521, %v552
        %v570 = vsub.f32 %v522, %v554
        %v571 = vmul.f32 %v555, 1.442695
        %v572 = vpow.pop %v571
        %v573 = vmul.f32 %v556, 1.442695
        %v574 = vpow.pop %v573
        %v575 = vmul.f32 %v557, 1.442695
        %v576 = vpow.pop %v575
        %v577 = vmul.f32 %v558, 1.442695
        %v578 = vpow.pop %v577
        %v579 = vmul.f32 %v559, 1.442695
        %v580 = vpow.pop %v579
        %v581 = vmul.f32 %v560, 1.442695
        %v582 = vpow.pop %v581
        %v583 = vmul.f32 %v561, 1.442695
        %v584 = vpow.pop %v583
        %v585 = vmul.f32 %v562, 1.442695
        %v586 = vpow.pop %v585
        %v587 = vmul.f32 %v563, 1.442695
        %v588 = vpow.pop %v587
        %v589 = vmul.f32 %v564, 1.442695
        %v590 = vpow.pop %v589
        %v591 = vmul.f32 %v565, 1.442695
        %v592 = vpow.pop %v591
        %v593 = vmul.f32 %v566, 1.442695
        %v594 = vpow.pop %v593
        %v595 = vmul.f32 %v567, 1.442695
        %v596 = vpow.pop %v595
        %v597 = vmul.f32 %v568, 1.442695
        %v598 = vpow.pop %v597
        %v599 = vmul.f32 %v569, 1.442695
        %v600 = vpow.pop %v599
        %v601 = vmul.f32 %v570, 1.442695
        %v602 = vpow.pop %v601
        %603 = vadd.xlane.f32.xlu0 %v572
        %v604 = vpop.xlane.xlu0 %603
        %605 = vadd.xlane.f32.xlu0 %v574
        %v606 = vpop.xlane.xlu0 %605
        %607 = vadd.xlane.f32.xlu0 %v576
        %v608 = vpop.xlane.xlu0 %607
        %609 = vadd.xlane.f32.xlu0 %v578
        %v610 = vpop.xlane.xlu0 %609
        %611 = vadd.xlane.f32.xlu0 %v580
        %v612 = vpop.xlane.xlu0 %611
        %613 = vadd.xlane.f32.xlu0 %v582
        %v614 = vpop.xlane.xlu0 %613
        %615 = vadd.xlane.f32.xlu0 %v584
        %v616 = vpop.xlane.xlu0 %615
        %617 = vadd.xlane.f32.xlu0 %v586
        %v618 = vpop.xlane.xlu0 %617
        %619 = vadd.xlane.f32.xlu0 %v588
        %v620 = vpop.xlane.xlu0 %619
        %621 = vadd.xlane.f32.xlu0 %v590
        %v622 = vpop.xlane.xlu0 %621
        %623 = vadd.xlane.f32.xlu0 %v592
        %v624 = vpop.xlane.xlu0 %623
        %625 = vadd.xlane.f32.xlu0 %v594
        %v626 = vpop.xlane.xlu0 %625
        %627 = vadd.xlane.f32.xlu0 %v596
        %v628 = vpop.xlane.xlu0 %627
        %629 = vadd.xlane.f32.xlu0 %v598
        %v630 = vpop.xlane.xlu0 %629
        %631 = vadd.xlane.f32.xlu0 %v600
        %v632 = vpop.xlane.xlu0 %631
        %633 = vadd.xlane.f32.xlu0 %v602
        %v634 = vpop.xlane.xlu0 %633
        %v635 = vrcp.pop %v604
        %v636 = vmul.f32 %v604, %v635
        %v637 = vsub.f32 1.0, %v636
        %v638 = vmul.f32 %v635, %v637
        %v639 = vadd.f32 %v635, %v638
        %vm640 = vweird.f32 %v604
        %vm641 = vweird.f32 %v635
        %vm642 = vmor %vm640, %vm641
        %v643 = vsel %vm642, %v635, %v639
        %v644 = vand.u32 2147483647, %v604
        %vm645 = vcmp.eq.f32.partialorder %v644, 8.507059e+37
        %v646 = vand.u32 %v604, 2147483648
        %v647 = vor.u32 1.1754944e-38, %v646
        %v648 = vsel %vm645, %v647, %v643
        %v649 = vrcp.pop %v606
        %v650 = vmul.f32 %v606, %v649
        %v651 = vsub.f32 1.0, %v650
        %v652 = vmul.f32 %v649, %v651
        %v653 = vadd.f32 %v649, %v652
        %vm654 = vweird.f32 %v606
        %vm655 = vweird.f32 %v649
        %vm656 = vmor %vm654, %vm655
        %v657 = vsel %vm656, %v649, %v653
        %v658 = vand.u32 2147483647, %v606
        %vm659 = vcmp.eq.f32.partialorder %v658, 8.507059e+37
        %v660 = vand.u32 %v606, 2147483648
        %v661 = vor.u32 1.1754944e-38, %v660
        %v662 = vsel %vm659, %v661, %v657
        %v663 = vrcp.pop %v608
        %v664 = vmul.f32 %v608, %v663
        %v665 = vsub.f32 1.0, %v664
        %v666 = vmul.f32 %v663, %v665
        %v667 = vadd.f32 %v663, %v666
        %vm668 = vweird.f32 %v608
        %vm669 = vweird.f32 %v663
        %vm670 = vmor %vm668, %vm669
        %v671 = vsel %vm670, %v663, %v667
        %v672 = vand.u32 2147483647, %v608
        %vm673 = vcmp.eq.f32.partialorder %v672, 8.507059e+37
        %v674 = vand.u32 %v608, 2147483648
        %v675 = vor.u32 1.1754944e-38, %v674
        %v676 = vsel %vm673, %v675, %v671
        %v677 = vrcp.pop %v610
        %v678 = vmul.f32 %v610, %v677
        %v679 = vsub.f32 1.0, %v678
        %v680 = vmul.f32 %v677, %v679
        %v681 = vadd.f32 %v677, %v680
        %vm682 = vweird.f32 %v610
        %vm683 = vweird.f32 %v677
        %vm684 = vmor %vm682, %vm683
        %v685 = vsel %vm684, %v677, %v681
        %v686 = vand.u32 2147483647, %v610
        %vm687 = vcmp.eq.f32.partialorder %v686, 8.507059e+37
        %v688 = vand.u32 %v610, 2147483648
        %v689 = vor.u32 1.1754944e-38, %v688
        %v690 = vsel %vm687, %v689, %v685
        %v691 = vrcp.pop %v612
        %v692 = vmul.f32 %v612, %v691
        %v693 = vsub.f32 1.0, %v692
        %v694 = vmul.f32 %v691, %v693
        %v695 = vadd.f32 %v691, %v694
        %vm696 = vweird.f32 %v612
        %vm697 = vweird.f32 %v691
        %vm698 = vmor %vm696, %vm697
        %v699 = vsel %vm698, %v691, %v695
        %v700 = vand.u32 2147483647, %v612
        %vm701 = vcmp.eq.f32.partialorder %v700, 8.507059e+37
        %v702 = vand.u32 %v612, 2147483648
        %v703 = vor.u32 1.1754944e-38, %v702
        %v704 = vsel %vm701, %v703, %v699
        %v705 = vrcp.pop %v614
        %v706 = vmul.f32 %v614, %v705
        %v707 = vsub.f32 1.0, %v706
        %v708 = vmul.f32 %v705, %v707
        %v709 = vadd.f32 %v705, %v708
        %vm710 = vweird.f32 %v614
        %vm711 = vweird.f32 %v705
        %vm712 = vmor %vm710, %vm711
        %v713 = vsel %vm712, %v705, %v709
        %v714 = vand.u32 2147483647, %v614
        %vm715 = vcmp.eq.f32.partialorder %v714, 8.507059e+37
        %v716 = vand.u32 %v614, 2147483648
        %v717 = vor.u32 1.1754944e-38, %v716
        %v718 = vsel %vm715, %v717, %v713
        %v719 = vrcp.pop %v616
        %v720 = vmul.f32 %v616, %v719
        %v721 = vsub.f32 1.0, %v720
        %v722 = vmul.f32 %v719, %v721
        %v723 = vadd.f32 %v719, %v722
        %vm724 = vweird.f32 %v616
        %vm725 = vweird.f32 %v719
        %vm726 = vmor %vm724, %vm725
        %v727 = vsel %vm726, %v719, %v723
        %v728 = vand.u32 2147483647, %v616
        %vm729 = vcmp.eq.f32.partialorder %v728, 8.507059e+37
        %v730 = vand.u32 %v616, 2147483648
        %v731 = vor.u32 1.1754944e-38, %v730
        %v732 = vsel %vm729, %v731, %v727
        %v733 = vrcp.pop %v618
        %v734 = vmul.f32 %v618, %v733
        %v735 = vsub.f32 1.0, %v734
        %v736 = vmul.f32 %v733, %v735
        %v737 = vadd.f32 %v733, %v736
        %vm738 = vweird.f32 %v618
        %vm739 = vweird.f32 %v733
        %vm740 = vmor %vm738, %vm739
        %v741 = vsel %vm740, %v733, %v737
        %v742 = vand.u32 2147483647, %v618
        %vm743 = vcmp.eq.f32.partialorder %v742, 8.507059e+37
        %v744 = vand.u32 %v618, 2147483648
        %v745 = vor.u32 1.1754944e-38, %v744
        %v746 = vsel %vm743, %v745, %v741
        %v747 = vrcp.pop %v620
        %v748 = vmul.f32 %v620, %v747
        %v749 = vsub.f32 1.0, %v748
        %v750 = vmul.f32 %v747, %v749
        %v751 = vadd.f32 %v747, %v750
        %vm752 = vweird.f32 %v620
        %vm753 = vweird.f32 %v747
        %vm754 = vmor %vm752, %vm753
        %v755 = vsel %vm754, %v747, %v751
        %v756 = vand.u32 2147483647, %v620
        %vm757 = vcmp.eq.f32.partialorder %v756, 8.507059e+37
        %v758 = vand.u32 %v620, 2147483648
        %v759 = vor.u32 1.1754944e-38, %v758
        %v760 = vsel %vm757, %v759, %v755
        %v761 = vrcp.pop %v622
        %v762 = vmul.f32 %v622, %v761
        %v763 = vsub.f32 1.0, %v762
        %v764 = vmul.f32 %v761, %v763
        %v765 = vadd.f32 %v761, %v764
        %vm766 = vweird.f32 %v622
        %vm767 = vweird.f32 %v761
        %vm768 = vmor %vm766, %vm767
        %v769 = vsel %vm768, %v761, %v765
        %v770 = vand.u32 2147483647, %v622
        %vm771 = vcmp.eq.f32.partialorder %v770, 8.507059e+37
        %v772 = vand.u32 %v622, 2147483648
        %v773 = vor.u32 1.1754944e-38, %v772
        %v774 = vsel %vm771, %v773, %v769
        %v775 = vrcp.pop %v624
        %v776 = vmul.f32 %v624, %v775
        %v777 = vsub.f32 1.0, %v776
        %v778 = vmul.f32 %v775, %v777
        %v779 = vadd.f32 %v775, %v778
        %vm780 = vweird.f32 %v624
        %vm781 = vweird.f32 %v775
        %vm782 = vmor %vm780, %vm781
        %v783 = vsel %vm782, %v775, %v779
        %v784 = vand.u32 2147483647, %v624
        %vm785 = vcmp.eq.f32.partialorder %v784, 8.507059e+37
        %v786 = vand.u32 %v624, 2147483648
        %v787 = vor.u32 1.1754944e-38, %v786
        %v788 = vsel %vm785, %v787, %v783
        %v789 = vrcp.pop %v626
        %v790 = vmul.f32 %v626, %v789
        %v791 = vsub.f32 1.0, %v790
        %v792 = vmul.f32 %v789, %v791
        %v793 = vadd.f32 %v789, %v792
        %vm794 = vweird.f32 %v626
        %vm795 = vweird.f32 %v789
        %vm796 = vmor %vm794, %vm795
        %v797 = vsel %vm796, %v789, %v793
        %v798 = vand.u32 2147483647, %v626
        %vm799 = vcmp.eq.f32.partialorder %v798, 8.507059e+37
        %v800 = vand.u32 %v626, 2147483648
        %v801 = vor.u32 1.1754944e-38, %v800
        %v802 = vsel %vm799, %v801, %v797
        %v803 = vrcp.pop %v628
        %v804 = vmul.f32 %v628, %v803
        %v805 = vsub.f32 1.0, %v804
        %v806 = vmul.f32 %v803, %v805
        %v807 = vadd.f32 %v803, %v806
        %vm808 = vweird.f32 %v628
        %vm809 = vweird.f32 %v803
        %vm810 = vmor %vm808, %vm809
        %v811 = vsel %vm810, %v803, %v807
        %v812 = vand.u32 2147483647, %v628
        %vm813 = vcmp.eq.f32.partialorder %v812, 8.507059e+37
        %v814 = vand.u32 %v628, 2147483648
        %v815 = vor.u32 1.1754944e-38, %v814
        %v816 = vsel %vm813, %v815, %v811
        %v817 = vrcp.pop %v630
        %v818 = vmul.f32 %v630, %v817
        %v819 = vsub.f32 1.0, %v818
        %v820 = vmul.f32 %v817, %v819
        %v821 = vadd.f32 %v817, %v820
        %vm822 = vweird.f32 %v630
        %vm823 = vweird.f32 %v817
        %vm824 = vmor %vm822, %vm823
        %v825 = vsel %vm824, %v817, %v821
        %v826 = vand.u32 2147483647, %v630
        %vm827 = vcmp.eq.f32.partialorder %v826, 8.507059e+37
        %v828 = vand.u32 %v630, 2147483648
        %v829 = vor.u32 1.1754944e-38, %v828
        %v830 = vsel %vm827, %v829, %v825
        %v831 = vrcp.pop %v632
        %v832 = vmul.f32 %v632, %v831
        %v833 = vsub.f32 1.0, %v832
        %v834 = vmul.f32 %v831, %v833
        %v835 = vadd.f32 %v831, %v834
        %vm836 = vweird.f32 %v632
        %vm837 = vweird.f32 %v831
        %vm838 = vmor %vm836, %vm837
        %v839 = vsel %vm838, %v831, %v835
        %v840 = vand.u32 2147483647, %v632
        %vm841 = vcmp.eq.f32.partialorder %v840, 8.507059e+37
        %v842 = vand.u32 %v632, 2147483648
        %v843 = vor.u32 1.1754944e-38, %v842
        %v844 = vsel %vm841, %v843, %v839
        %v845 = vrcp.pop %v634
        %v846 = vmul.f32 %v634, %v845
        %v847 = vsub.f32 1.0, %v846
        %v848 = vmul.f32 %v845, %v847
        %v849 = vadd.f32 %v845, %v848
        %vm850 = vweird.f32 %v634
        %vm851 = vweird.f32 %v845
        %vm852 = vmor %vm850, %vm851
        %v853 = vsel %vm852, %v845, %v849
        %v854 = vand.u32 2147483647, %v634
        %vm855 = vcmp.eq.f32.partialorder %v854, 8.507059e+37
        %v856 = vand.u32 %v634, 2147483648
        %v857 = vor.u32 1.1754944e-38, %v856
        %v858 = vsel %vm855, %v857, %v853
        %v859 = vmul.f32 %v572, %v648
        %v860 = vmul.f32 %v574, %v662
        %v861 = vmul.f32 %v576, %v676
        %v862 = vmul.f32 %v578, %v690
        %v863 = vmul.f32 %v580, %v704
        %v864 = vmul.f32 %v582, %v718
        %v865 = vmul.f32 %v584, %v732
        %v866 = vmul.f32 %v586, %v746
        %v867 = vmul.f32 %v588, %v760
        %v868 = vmul.f32 %v590, %v774
        %v869 = vmul.f32 %v592, %v788
        %v870 = vmul.f32 %v594, %v802
        %v871 = vmul.f32 %v596, %v816
        %v872 = vmul.f32 %v598, %v830
        %v873 = vmul.f32 %v600, %v844
        %v874 = vmul.f32 %v602, %v858
        %v875 = vsel %vm506, %v457, %v859
        %v876 = vsel %vm506, %v460, %v860
        %v877 = vsel %vm506, %v463, %v861
        %v878 = vsel %vm506, %v466, %v862
        %v879 = vsel %vm506, %v469, %v863
        %v880 = vsel %vm506, %v472, %v864
        %v881 = vsel %vm506, %v475, %v865
        %v882 = vsel %vm506, %v478, %v866
        %v883 = vsel %vm506, %v481, %v867
        %v884 = vsel %vm506, %v484, %v868
        %v885 = vsel %vm506, %v487, %v869
        %v886 = vsel %vm506, %v490, %v870
        %v887 = vsel %vm506, %v493, %v871
        %v888 = vsel %vm506, %v496, %v872
        %v889 = vsel %vm506, %v499, %v873
        %v890 = vsel %vm506, %v502, %v874
        %891 = vst [vmem:[%s218] sm:$0xff] %v875
        %892 = vst [vmem:[%s218 + $0x8] sm:$0xff] %v876
        %893 = vst [vmem:[%s218 + $0x10] sm:$0xff] %v877
        %894 = vst [vmem:[%s218 + $0x18] sm:$0xff] %v878
        %895 = vst [vmem:[%s218 + $0x20] sm:$0xff] %v879
        %896 = vst [vmem:[%s218 + $0x28] sm:$0xff] %v880
        %897 = vst [vmem:[%s218 + $0x30] sm:$0xff] %v881
        %898 = vst [vmem:[%s218 + $0x38] sm:$0xff] %v882
        %899 = vst [vmem:[%s218 + $0x40] sm:$0xff] %v883
        %900 = vst [vmem:[%s218 + $0x48] sm:$0xff] %v884
        %901 = vst [vmem:[%s218 + $0x50] sm:$0xff] %v885
        %902 = vst [vmem:[%s218 + $0x58] sm:$0xff] %v886
        %903 = vst [vmem:[%s218 + $0x60] sm:$0xff] %v887
        %904 = vst [vmem:[%s218 + $0x68] sm:$0xff] %v888
        %905 = vst [vmem:[%s218 + $0x70] sm:$0xff] %v889
        %906 = vst [vmem:[%s218 + $0x78] sm:$0xff] %v890
        %s907 = sand.u32 %s137, 1
        %s908 = scalar_lea.sflag [#allocation3], %s907
        %s909 = sand.u32 %s137, 1
        %s910 = smul.addr %s909, 128
        %s911 = scalar_lea.vmem [#allocation2], %s910
        // Predicated region
        $region41: #{tpu_custom_call.1} parent=39 // pred_check
          %p912 = pneg %p147
        $region42: #{tpu_custom_call.1} parent=39 // pred_check_branch
          %914 = sbr.rel (%p912) target = $region44
        $region43: #{tpu_custom_call.1} parent=39 // pred_region
          %s915 = smul.u32 16, %s19
          %917 = vsyncadd %s908, 0
          %s918 = smul.addr %s915, 8
          %s919 = scalar_lea.hbm %s5, %s918
          %s920 = sshll.u32 %s911, 4
          %s921 = int_to_ptr.vmem [resolvable:$true] %s920
          %s922 = sshll.u32 %s919, 4
          %s923 = int_to_ptr.hbm [resolvable:$true] %s922
          %928 = dma.vmem_to_hbm [thread:$0]  %s921, 2048, %s923, %s908, 128, 128, 8
        $region44: #{tpu_custom_call.1} parent=39 // pred_fallthru
          _
      $region40: #{tpu_custom_call.1} parent=5 // pred_fallthru
        _
      %p929 = scmp.le.s32.totalorder 2, %s14
      // Predicated region
      $region45: #{tpu_custom_call.1} parent=5 // pred_check
        %p930 = pneg %p929
      $region46: #{tpu_custom_call.1} parent=5 // pred_check_branch
        %932 = sbr.rel (%p930) target = $region48
      $region47: #{tpu_custom_call.1} parent=5 // pred_region
        %s933 = ssub.s32 %s14, 2
        // Predicated region
        $region49: #{tpu_custom_call.1} parent=47 // pred_check
          %p934 = pneg %p153
        $region50: #{tpu_custom_call.1} parent=47 // pred_check_branch
          %936 = sbr.rel (%p934) target = $region52
        $region51: #{tpu_custom_call.1} parent=47 // pred_region
          %s937 = sand.u32 %s138, 1
          %s938 = scalar_lea.sflag [#allocation3], %s937
          %s939 = sand.u32 %s138, 1
          %s940 = smul.addr %s939, 128
          %s941 = scalar_lea.vmem [#allocation2], %s940
          %943 = dma.done %s938, 2048
        $region52: #{tpu_custom_call.1} parent=47 // pred_fallthru
          _
      $region48: #{tpu_custom_call.1} parent=5 // pred_fallthru
        _
    $region6: #{tpu_custom_call.1} parent=1 // loop_footer
      %s18 = sadd.s32 1, %s14
    $region7: #{tpu_custom_call.1} parent=1 // loop_footer_branch
      %13 = sbr.rel target = $region3
    $region8: #{tpu_custom_call.1} parent=1 // loop_exit
      _
    %944 = vsyncpa [#allocation3], 1
    %s945 = scalar_lea.sflag [#allocation3], 1
    %946 = vsyncpa %s945, 1

</llo_original>
